<compile_context>
chip_gen: v6e
topology: v6e:2x2x1
jax: 0.10.0
libtpu: 0.0.40
codegen_flags: <defaults>
</compile_context>

<pallas_src>
import functools

import jax
import jax.numpy as jnp
from jax.experimental import pallas as pl
from jax.experimental.pallas import tpu as pltpu


def _tied_se_kernel(x_ref, w1_ref, b1_ref, w2_ref, b2_ref, o_ref, *, inv_hw):
    # x_ref / o_ref : (nt, c_g, hw)  -- nt row-groups per grid step, TRUE hw on lanes
    # w1 : (c_g, hidden), b1 : (1, hidden), w2 : (hidden, c_g), b2 : (1, c_g)

    # Squeeze: global average pool over the spatial (lane) axis.  Accumulate in
    # f32 without materializing a full-tile f32 copy of x.  Mosaic masks the
    # trailing partial vreg when hw % 128 != 0, so lane padding never leaks in.
    pooled = jnp.sum(x_ref[...], axis=-1, dtype=jnp.float32) * inv_hw       # (nt, c_g)

    # Excitation: Linear -> ReLU -> Linear -> Sigmoid on the tiny pooled vector.
    h = jnp.dot(pooled, w1_ref[...], preferred_element_type=jnp.float32) + b1_ref[...]
    h = jnp.maximum(h, 0.0)
    y = jnp.dot(h, w2_ref[...], preferred_element_type=jnp.float32) + b2_ref[...]
    y = jax.nn.sigmoid(y)                                                    # (nt, c_g)

    # Scale: stream x straight from VMEM, one multiply per element in the
    # native dtype (only the small gate vector is cast).
    o_ref[...] = x_ref[...] * y[:, :, None].astype(o_ref.dtype)


def _cdiv(a, b):
    return -(-a // b)


def _choose_tiling(n_rows, c_g, hw, dtype):
    """Pick (#row-groups per tile, #grid steps, vmem_limit_bytes)."""
    itemsize = jnp.dtype(dtype).itemsize
    pack = max(8, 32 // itemsize)          # sublanes per vreg: f32 -> 8, bf16 -> 16, i8 -> 32
    c_g_pad = _cdiv(c_g, pack) * pack      # VMEM-side sublane padding
    hw_pad = _cdiv(hw, 128) * 128          # VMEM-side lane padding
    group_bytes = c_g_pad * hw_pad * itemsize   # VMEM footprint of one row-group slice

    vmem_cap = 128 << 20
    try:
        info = pltpu.get_tpu_info()
        vmem_cap = int(getattr(info, "vmem_capacity_bytes", vmem_cap))
    except Exception:
        pass

    small_vmem = vmem_cap <= (64 << 20)          # v7x-class TensorCore (64 MiB VMEM)
    target_tile = (6 << 20) if small_vmem else (8 << 20)
    vmem_limit = (44 << 20) if small_vmem else (64 << 20)

    nt = max(1, min(n_rows, target_tile // group_bytes))
    steps = _cdiv(n_rows, nt)

    if small_vmem:
        # Two TensorCores share the "parallel" grid axis on v7x: keep the step
        # count even (and >= 2) whenever there is more than one row-group.
        if steps == 1 and n_rows >= 2:
            steps = 2
        elif steps > 1 and steps % 2 == 1:
            steps += 1
        nt = _cdiv(n_rows, steps)
        steps = _cdiv(n_rows, nt)

    # Respect the scoped-VMEM budget: in + out tiles, double-buffered, + slack.
    while nt > 1 and 4 * nt * group_bytes + (2 << 20) > vmem_limit:
        nt -= 1
        steps = _cdiv(n_rows, nt)
    if 4 * nt * group_bytes + (2 << 20) > vmem_limit:
        # A single (c_g, hw) group exceeds the target budget; raise the limit
        # toward physical VMEM.  (Beyond that an hw-tiled two-pass variant
        # would be needed, which realistic SE shapes never require.)
        vmem_limit = min(int(vmem_cap * 0.9), 4 * group_bytes + (4 << 20))

    return nt, steps, int(vmem_limit)


def tied_se_layer(x, w1, b1, w2, b2, *, B=1, tile_rows=None):
    """x: (b, c, h, w) NCHW.  w1/w2 are stored as (in, out), i.e. the transpose
    of the PyTorch nn.Linear weights; b1/b2 are the Linear biases."""
    b, c, h, w = x.shape
    assert c % B == 0
    c_g = c // B
    hw = h * w
    hidden = w1.shape[1]
    n_rows = b * B                          # one row-group = (c_g, hw)

    # Pure metadata reshape (NCHW is contiguous): no HBM traffic, no padding.
    x_r = x.reshape(n_rows, c_g, hw)
    b1_r = b1.reshape(1, hidden)
    b2_r = b2.reshape(1, c_g)

    nt, steps, vmem_limit = _choose_tiling(n_rows, c_g, hw, x.dtype)
    if tile_rows is not None:               # test / tuning override
        nt = max(1, min(int(tile_rows), n_rows))
        steps = _cdiv(n_rows, nt)

    kernel = functools.partial(_tied_se_kernel, inv_hw=1.0 / hw)

    itemsize = x.dtype.itemsize
    n_elem = n_rows * c_g * hw
    cost = pl.CostEstimate(
        flops=int(2 * n_elem + 4 * n_rows * c_g * hidden),
        transcendentals=int(n_rows * c_g),
        bytes_accessed=int(2 * n_elem * itemsize
                           + (w1.size + b1.size + w2.size + b2.size) * w1.dtype.itemsize),
    )

    out = pl.pallas_call(
        kernel,
        out_shape=jax.ShapeDtypeStruct((n_rows, c_g, hw), x.dtype),
        grid=(steps,),
        in_specs=[
            pl.BlockSpec((nt, c_g, hw), lambda i: (i, 0, 0)),   # x tile (ragged last block OK)
            pl.BlockSpec((c_g, hidden), lambda i: (0, 0)),      # w1 (VMEM resident)
            pl.BlockSpec((1, hidden), lambda i: (0, 0)),        # b1 (VMEM resident)
            pl.BlockSpec((hidden, c_g), lambda i: (0, 0)),      # w2 (VMEM resident)
            pl.BlockSpec((1, c_g), lambda i: (0, 0)),           # b2 (VMEM resident)
        ],
        out_specs=pl.BlockSpec((nt, c_g, hw), lambda i: (i, 0, 0)),
        compiler_params=pltpu.CompilerParams(
            dimension_semantics=("parallel",),
            vmem_limit_bytes=vmem_limit),
        cost_estimate=cost,
    )(x_r, w1, b1_r, w2, b2_r)

    return out.reshape(b, c, h, w)


def _reference(x, w1, b1, w2, b2, B):
    """Pure-JAX reference of the PyTorch TiedSELayer forward."""
    b, c, _, _ = x.shape
    c_g = c // B
    pooled = x.mean(axis=(2, 3)).reshape(b * B, c_g)
    y = jax.nn.sigmoid(jnp.maximum(pooled @ w1 + b1, 0.0) @ w2 + b2)
    return x * y.reshape(b, c, 1, 1)


if __name__ == "__main__":
    key = jax.random.PRNGKey(0)
    reduction = 16

    # (b, c, h, w, B, tile_rows):
    #   1) module toy config (hw % 128 == 0, B = 1)
    #   2) hw % 128 != 0 (14x14 -> masked lane tail) and tied blocks B = 2
    #   3) forced small tile -> ragged last block (3 row-groups, 2 per tile)
    configs = [
        (2, 4, 16, 16, 1, None),
        (2, 4, 14, 14, 2, None),
        (3, 8, 14, 14, 1, 2),
    ]

    for (b, c, h, w, B, tile_rows) in configs:
        c_g = c // B
        hidden = max(2, c_g // reduction)
        key, k1, k2, k3, k4, k5 = jax.random.split(key, 6)
        x = jax.random.normal(k1, (b, c, h, w), jnp.float32)
        # Deterministic synthetic parameters (shapes per nn.Linear, transposed).
        w1 = jax.random.normal(k2, (c_g, hidden), jnp.float32) * 0.5
        b1 = jax.random.normal(k3, (hidden,), jnp.float32) * 0.1
        w2 = jax.random.normal(k4, (hidden, c_g), jnp.float32) * 0.5
        b2 = jax.random.normal(k5, (c_g,), jnp.float32) * 0.1

        out = jax.block_until_ready(
            tied_se_layer(x, w1, b1, w2, b2, B=B, tile_rows=tile_rows))
        ref = _reference(x, w1, b1, w2, b2, B)
        assert out.shape == x.shape
        assert jnp.allclose(out, ref, atol=1e-4, rtol=1e-4), (
            f"mismatch vs reference for config {(b, c, h, w, B, tile_rows)}")

    print("KERNEL_OK")
</pallas_src>

<mosaic_0001>
module attributes {stable_mosaic.version = 11 : i64} {
  func.func @_tied_se_kernel(%arg0: i32, %arg1: memref<2x4x256xf32, #tpu.memory_space<vmem>>, %arg2: memref<4x2xf32, #tpu.memory_space<vmem>>, %arg3: memref<1x2xf32, #tpu.memory_space<vmem>>, %arg4: memref<2x4xf32, #tpu.memory_space<vmem>>, %arg5: memref<1x4xf32, #tpu.memory_space<vmem>>, %arg6: memref<2x4x256xf32, #tpu.memory_space<vmem>>) attributes {dimension_semantics = [#tpu.dimension_semantics<parallel>], iteration_bounds = array<i64: 1>, scalar_prefetch = 0 : i64, scratch_operands = 0 : i64, tpu.core_type = #tpu.core_type<tc>, window_params = [{transform_indices = @transform_0, window_bounds = array<i64: 2, 4, 256>}, {pipeline_mode = #tpu.pipeline_mode<synchronous>, transform_indices = @transform_1, window_bounds = array<i64: 4, 2>}, {pipeline_mode = #tpu.pipeline_mode<synchronous>, transform_indices = @transform_2, window_bounds = array<i64: 1, 2>}, {pipeline_mode = #tpu.pipeline_mode<synchronous>, transform_indices = @transform_3, window_bounds = array<i64: 2, 4>}, {pipeline_mode = #tpu.pipeline_mode<synchronous>, transform_indices = @transform_4, window_bounds = array<i64: 1, 4>}, {transform_indices = @transform_5, window_bounds = array<i64: 2, 4, 256>}]} {
    %c0 = arith.constant 0 : index
    %c0_0 = arith.constant 0 : index
    %c0_1 = arith.constant 0 : index
    %0 = vector.load %arg1[%c0, %c0_0, %c0_1] : memref<2x4x256xf32, #tpu.memory_space<vmem>>, vector<2x4x256xf32>
    %cst = arith.constant dense<0.000000e+00> : vector<2x4xf32>
    %1 = vector.multi_reduction <add>, %0, %cst [2] : vector<2x4x256xf32> to vector<2x4xf32>
    %cst_2 = arith.constant 3.906250e-03 : f32
    %2 = vector.broadcast %cst_2 : f32 to vector<2x4xf32>
    %3 = arith.mulf %1, %2 : vector<2x4xf32>
    %c0_3 = arith.constant 0 : index
    %c0_4 = arith.constant 0 : index
    %4 = vector.load %arg2[%c0_3, %c0_4] : memref<4x2xf32, #tpu.memory_space<vmem>>, vector<4x2xf32>
    %cst_5 = arith.constant dense<0.000000e+00> : vector<2x2xf32>
    %5 = tpu.matmul %3, %4, %cst_5 {dimension_numbers = #tpu.dot_dimension_numbers<[1], [0], [0], [1], [0, 0, 1, 1], [], []>} : vector<2x4xf32>, vector<4x2xf32>, vector<2x2xf32> -> vector<2x2xf32>
    %c0_6 = arith.constant 0 : index
    %c0_7 = arith.constant 0 : index
    %6 = vector.load %arg3[%c0_6, %c0_7] : memref<1x2xf32, #tpu.memory_space<vmem>>, vector<1x2xf32>
    %7 = vector.broadcast %6 : vector<1x2xf32> to vector<2x2xf32>
    %8 = arith.addf %5, %7 : vector<2x2xf32>
    %cst_8 = arith.constant 0.000000e+00 : f32
    %9 = vector.broadcast %cst_8 : f32 to vector<2x2xf32>
    %10 = arith.maximumf %8, %9 : vector<2x2xf32>
    %c0_9 = arith.constant 0 : index
    %c0_10 = arith.constant 0 : index
    %11 = vector.load %arg4[%c0_9, %c0_10] : memref<2x4xf32, #tpu.memory_space<vmem>>, vector<2x4xf32>
    %cst_11 = arith.constant dense<0.000000e+00> : vector<2x4xf32>
    %12 = tpu.matmul %10, %11, %cst_11 {dimension_numbers = #tpu.dot_dimension_numbers<[1], [0], [0], [1], [0, 0, 1, 1], [], []>} : vector<2x2xf32>, vector<2x4xf32>, vector<2x4xf32> -> vector<2x4xf32>
    %c0_12 = arith.constant 0 : index
    %c0_13 = arith.constant 0 : index
    %13 = vector.load %arg5[%c0_12, %c0_13] : memref<1x4xf32, #tpu.memory_space<vmem>>, vector<1x4xf32>
    %14 = vector.broadcast %13 : vector<1x4xf32> to vector<2x4xf32>
    %15 = arith.addf %12, %14 : vector<2x4xf32>
    %16 = arith.negf %15 : vector<2x4xf32>
    %17 = math.exp %16 : vector<2x4xf32>
    %cst_14 = arith.constant 1.000000e+00 : f32
    %18 = vector.broadcast %cst_14 : f32 to vector<2x4xf32>
    %19 = arith.addf %18, %17 : vector<2x4xf32>
    %20 = arith.divf %18, %19 : vector<2x4xf32>
    %c0_15 = arith.constant 0 : index
    %c0_16 = arith.constant 0 : index
    %c0_17 = arith.constant 0 : index
    %21 = vector.load %arg1[%c0_15, %c0_16, %c0_17] : memref<2x4x256xf32, #tpu.memory_space<vmem>>, vector<2x4x256xf32>
    %22 = vector.shape_cast %20 : vector<2x4xf32> to vector<2x4x1xf32>
    %23 = vector.broadcast %22 : vector<2x4x1xf32> to vector<2x4x256xf32>
    %24 = arith.mulf %21, %23 : vector<2x4x256xf32>
    %c0_18 = arith.constant 0 : index
    %c0_19 = arith.constant 0 : index
    %c0_20 = arith.constant 0 : index
    %25 = vector.load %arg6[%c0_18, %c0_19, %c0_20] : memref<2x4x256xf32, #tpu.memory_space<vmem>>, vector<2x4x256xf32>
    tpu.vector_store %arg6[%c0_18, %c0_19, %c0_20], %24 {strides = array<i32>} : memref<2x4x256xf32, #tpu.memory_space<vmem>>, vector<2x4x256xf32>,
    return
  }
  func.func @transform_0(%arg0: i32) -> (i32, i32, i32) {
    %c0_i32 = arith.constant 0 : i32
    %c0_i32_0 = arith.constant 0 : i32
    %c0_i32_1 = arith.constant 0 : i32
    return %arg0, %c0_i32, %c0_i32_0 : i32, i32, i32
  }
  func.func @transform_1(%arg0: i32) -> (i32, i32) {
    %c0_i32 = arith.constant 0 : i32
    %c0_i32_0 = arith.constant 0 : i32
    %c0_i32_1 = arith.constant 0 : i32
    return %c0_i32, %c0_i32_0 : i32, i32
  }
  func.func @transform_2(%arg0: i32) -> (i32, i32) {
    %c0_i32 = arith.constant 0 : i32
    %c0_i32_0 = arith.constant 0 : i32
    %c0_i32_1 = arith.constant 0 : i32
    return %c0_i32, %c0_i32_0 : i32, i32
  }
  func.func @transform_3(%arg0: i32) -> (i32, i32) {
    %c0_i32 = arith.constant 0 : i32
    %c0_i32_0 = arith.constant 0 : i32
    %c0_i32_1 = arith.constant 0 : i32
    return %c0_i32, %c0_i32_0 : i32, i32
  }
  func.func @transform_4(%arg0: i32) -> (i32, i32) {
    %c0_i32 = arith.constant 0 : i32
    %c0_i32_0 = arith.constant 0 : i32
    %c0_i32_1 = arith.constant 0 : i32
    return %c0_i32, %c0_i32_0 : i32, i32
  }
  func.func @transform_5(%arg0: i32) -> (i32, i32, i32) {
    %c0_i32 = arith.constant 0 : i32
    %c0_i32_0 = arith.constant 0 : i32
    %c0_i32_1 = arith.constant 0 : i32
    return %arg0, %c0_i32, %c0_i32_0 : i32, i32, i32
  }
}

</mosaic_0001>

<llo_original>
// kernel: tpu_custom_call.1
$region0: #{tpu_custom_call.1}
  #allocation0 [shape = 'u32[]', space=smem, size = 0x4, offset = 0x4, fixed_abs, tag = 'smem constant byte address 0x4 - core index']
  #allocation1 [shape = 'u32[144,128]{1,0:T(1,128)}', space=vmem, size = 0x12000, scoped, tag = 'internal scratch']
  %s0 = inlined_call_operand.hbm [shape: f32[2,4,256], index: 0, kind: input, shape index: {}]
  %s1 = inlined_call_operand.vmem [shape: f32[4,2], index: 1, kind: input, shape index: {}]
  %s2 = inlined_call_operand.vmem [shape: f32[1,2], index: 2, kind: input, shape index: {}]
  %s3 = inlined_call_operand.vmem [shape: f32[2,4], index: 3, kind: input, shape index: {}]
  %s4 = inlined_call_operand.vmem [shape: f32[1,4], index: 4, kind: input, shape index: {}]
  %s5 = inlined_call_operand.hbm [shape: f32[2,4,256], index: 5, kind: output, shape index: {}]
  %s6 = sld [smem:[#allocation0]]
  $region34: #{tpu_custom_call.1} parent=0
    _
  %s8 = ssub.s32 1, %s6
  %s9 = scalar_select 0, %s8, %s6
  $region1: #{tpu_custom_call.1} parent=0
    #allocation2 [shape = 'u8[8192]{0}', space=vmem, size = 0x2000, scoped, tag = 'input window, operand 0, single buffered']
    #allocation3 [shape = 's32[1]{0}', space=sflag, size = 0x4, scoped, tag = 'scoped memory for tpu_custom_call.1']
    #allocation4 [shape = 's32[1]{0}', space=sflag, size = 0x4, scoped, tag = 'scoped memory for tpu_custom_call.1']
    #allocation5 [shape = 'u8[8192]{0}', space=vmem, size = 0x2000, scoped, tag = 'output window, operand 0, single buffered']
    %10 = vsyncpa [#allocation3], 0
    %11 = vsyncpa [#allocation4], 0
    // Predicated region
    $region2: #{tpu_custom_call.1} parent=1 // pred_check
      _
    $region3: #{tpu_custom_call.1} parent=1 // pred_check_branch
      %13 = sbr.rel (0) target = $region5
    $region4: #{tpu_custom_call.1} parent=1 // pred_region
      %s15 = ssub.s32 256, 256
      %16 = vsyncadd [#allocation3], %s15
      %s17 = sshll.u32 [#allocation2], 4
      %s18 = int_to_ptr.vmem [resolvable:$true] %s17
      %23 = dma.hbm_to_vmem [thread:$0]  %s0, 256, %s18, [#allocation3], 128, 128, 8
    $region5: #{tpu_custom_call.1} parent=1 // pred_fallthru
      _
    // Predicated region
    $region6: #{tpu_custom_call.1} parent=1 // pred_check
      _
    $region7: #{tpu_custom_call.1} parent=1 // pred_check_branch
      %25 = sbr.rel (0) target = $region9
    $region8: #{tpu_custom_call.1} parent=1 // pred_region
      _
    $region9: #{tpu_custom_call.1} parent=1 // pred_fallthru
      _
    // Predicated region
    $region10: #{tpu_custom_call.1} parent=1 // pred_check
      _
    $region11: #{tpu_custom_call.1} parent=1 // pred_check_branch
      %27 = sbr.rel (0) target = $region13
    $region12: #{tpu_custom_call.1} parent=1 // pred_region
      _
    $region13: #{tpu_custom_call.1} parent=1 // pred_fallthru
      _
    // Predicated region
    $region14: #{tpu_custom_call.1} parent=1 // pred_check
      _
    $region15: #{tpu_custom_call.1} parent=1 // pred_check_branch
      %29 = sbr.rel (0) target = $region17
    $region16: #{tpu_custom_call.1} parent=1 // pred_region
      _
    $region17: #{tpu_custom_call.1} parent=1 // pred_fallthru
      _
    // Predicated region
    $region18: #{tpu_custom_call.1} parent=1 // pred_check
      _
    $region19: #{tpu_custom_call.1} parent=1 // pred_check_branch
      %31 = sbr.rel (0) target = $region21
    $region20: #{tpu_custom_call.1} parent=1 // pred_region
      _
    $region21: #{tpu_custom_call.1} parent=1 // pred_fallthru
      _
    // Predicated region
    $region22: #{tpu_custom_call.1} parent=1 // pred_check
      _
    $region23: #{tpu_custom_call.1} parent=1 // pred_check_branch
      %33 = sbr.rel (0) target = $region25
    $region24: #{tpu_custom_call.1} parent=1 // pred_region
      %34 = dma.done [#allocation3], 256
    $region25: #{tpu_custom_call.1} parent=1 // pred_fallthru
      _
    %v35 = vld [vmem:[#allocation2] sm:$0xff]
    %v36 = vld [vmem:[#allocation2 + $0x8] sm:$0xff]
    %v39 = vcombine.high %v35, %v35
    %v40 = vcombine.high %v36, %v36
    %vm43 = vcmask 1043456
    %v44 = vsel %vm43, %v35, 0.0
    %v45 = vsel %vm43, %v39, 0.0
    %v46 = vadd.f32 %v44, %v45
    %47 = vadd.xlane.f32.xlu0 %v46
    %v48 = vpop.xlane.xlu0 %47
    %v49 = vsel %vm43, %v36, 0.0
    %v50 = vsel %vm43, %v40, 0.0
    %v51 = vadd.f32 %v49, %v50
    %52 = vadd.xlane.f32.xlu0 %v51
    %v53 = vpop.xlane.xlu0 %52
    %v54 = vmul.f32 %v48, 0.00390625
    %v55 = vmul.f32 %v53, 0.00390625
    %v56 = vld [vmem:[%s1] sm:$0xf]
    %v57 = vld [vmem:[%s2] sm:$0x1]
    %v59 = vlaneseq
    %v60 = vshrl.u32 %v59, 7
    %v61 = vsub.s32 0, %v60
    %v62 = vrot.slane %v57, %v61
    %v66 = vlaneseq
    %v67 = vand.u32 %v66, 127
    %v68 = vlaneseq
    %v69 = vshrl.u32 %v68, 7
    %v70 = vsub.s32 %v67, %v69
    %v71 = vrot.slane %v54, %v70
    %v72 = vlaneseq
    %v73 = vshrl.u32 %v72, 7
    %v74 = vsub.s32 %v67, %v73
    %v75 = vrot.slane %v55, %v74
    %vm76 = vcmask 1041409
    %v77 = vsel %vm76, %v75, %v71
    %vm78 = vcmask 31744
    %v79 = vsel %vm78, %v77, 0
    %v82 = vsel %vm43, %v56, 0
    %84 = vmatprep.subr.mxu0 0.0
    %85 = vmatpush1.msra.mxu0 0.0
    %86 = vmatprep.subr.mxu0 0.0
    %87 = vmatpush1.msra.mxu0 0.0
    %88 = vmatprep.subr.mxu0 0.0
    %89 = vmatpush1.msra.mxu0 0.0
    %90 = vmatprep.subr.mxu0 0.0
    %91 = vmatpush1.msra.mxu0 0.0
    %92 = vmatprep.subr.mxu0 0.0
    %93 = vmatpush1.msra.mxu0 0.0
    %94 = vmatprep.subr.mxu0 0.0
    %95 = vmatpush1.msra.mxu0 0.0
    %96 = vmatprep.subr.mxu0 0.0
    %97 = vmatpush1.msra.mxu0 0.0
    %98 = vmatprep.subr.mxu0 0.0
    %99 = vmatpush1.msra.mxu0 0.0
    %100 = vmatprep.subr.mxu0 0.0
    %101 = vmatpush1.msra.mxu0 0.0
    %102 = vmatprep.subr.mxu0 0.0
    %103 = vmatpush1.msra.mxu0 0.0
    %104 = vmatprep.subr.mxu0 0.0
    %105 = vmatpush1.msra.mxu0 0.0
    %106 = vmatprep.subr.mxu0 0.0
    %107 = vmatpush1.msra.mxu0 0.0
    %108 = vmatprep.subr.mxu0 0.0
    %109 = vmatpush1.msra.mxu0 0.0
    %110 = vmatprep.subr.mxu0 0.0
    %111 = vmatpush1.msra.mxu0 0.0
    %112 = vmatprep.subr.mxu0 0.0
    %113 = vmatpush1.msra.mxu0 0.0
    %114 = vmatprep.subr.mxu0 0.0
    %115 = vmatpush1.msra.mxu0 %v82
    %116 = vmatprep.subr.mxu0 0.0
    %117 = vmatpush2.msra.mxu0 0.0
    %118 = vmatprep.subr.mxu0 0.0
    %119 = vmatpush2.msra.mxu0 0.0
    %120 = vmatprep.subr.mxu0 0.0
    %121 = vmatpush2.msra.mxu0 0.0
    %122 = vmatprep.subr.mxu0 0.0
    %123 = vmatpush2.msra.mxu0 0.0
    %124 = vmatprep.subr.mxu0 0.0
    %125 = vmatpush2.msra.mxu0 0.0
    %126 = vmatprep.subr.mxu0 0.0
    %127 = vmatpush2.msra.mxu0 0.0
    %128 = vmatprep.subr.mxu0 0.0
    %129 = vmatpush2.msra.mxu0 0.0
    %130 = vmatprep.subr.mxu0 0.0
    %131 = vmatpush2.msra.mxu0 0.0
    %132 = vmatprep.subr.mxu0 0.0
    %133 = vmatpush2.msra.mxu0 0.0
    %134 = vmatprep.subr.mxu0 0.0
    %135 = vmatpush2.msra.mxu0 0.0
    %136 = vmatprep.subr.mxu0 0.0
    %137 = vmatpush2.msra.mxu0 0.0
    %138 = vmatprep.subr.mxu0 0.0
    %139 = vmatpush2.msra.mxu0 0.0
    %140 = vmatprep.subr.mxu0 0.0
    %141 = vmatpush2.msra.mxu0 0.0
    %142 = vmatprep.subr.mxu0 0.0
    %143 = vmatpush2.msra.mxu0 0.0
    %144 = vmatprep.subr.mxu0 0.0
    %145 = vmatpush2.msra.mxu0 0.0
    %146 = vmatprep.subr.mxu0 0.0
    %147 = vmatpush2.msra.mxu0 0.0
    %148 = vmatprep.mubr.f32.mxu0 0.0
    %149 = vmatmul.mubr.f32.gmra.mxu0 %v79
    %v150 = vpop.f32.mrf.mxu0
    %v151 = vadd.f32 %v62, %v150
    %v152 = vpop.f32.mrf.mxu0
    %153 = vdwg.mxu0
    %v154 = vmax.f32 %v151, 0.0
    %v155 = vld [vmem:[%s3] sm:$0x3]
    %v156 = vld [vmem:[%s4] sm:$0x1]
    %v158 = vlaneseq
    %v159 = vshrl.u32 %v158, 7
    %v160 = vsub.s32 0, %v159
    %v161 = vrot.slane %v156, %v160
    %vm163 = vcmask 15360
    %v165 = vsel %vm163, %v154, 0
    %vm167 = vcmask 1041408
    %v169 = vsel %vm167, %v155, 0
    %171 = vmatprep.subr.mxu0 0.0
    %172 = vmatpush1.msra.mxu0 0.0
    %173 = vmatprep.subr.mxu0 0.0
    %174 = vmatpush1.msra.mxu0 0.0
    %175 = vmatprep.subr.mxu0 0.0
    %176 = vmatpush1.msra.mxu0 0.0
    %177 = vmatprep.subr.mxu0 0.0
    %178 = vmatpush1.msra.mxu0 0.0
    %179 = vmatprep.subr.mxu0 0.0
    %180 = vmatpush1.msra.mxu0 0.0
    %181 = vmatprep.subr.mxu0 0.0
    %182 = vmatpush1.msra.mxu0 0.0
    %183 = vmatprep.subr.mxu0 0.0
    %184 = vmatpush1.msra.mxu0 0.0
    %185 = vmatprep.subr.mxu0 0.0
    %186 = vmatpush1.msra.mxu0 0.0
    %187 = vmatprep.subr.mxu0 0.0
    %188 = vmatpush1.msra.mxu0 0.0
    %189 = vmatprep.subr.mxu0 0.0
    %190 = vmatpush1.msra.mxu0 0.0
    %191 = vmatprep.subr.mxu0 0.0
    %192 = vmatpush1.msra.mxu0 0.0
    %193 = vmatprep.subr.mxu0 0.0
    %194 = vmatpush1.msra.mxu0 0.0
    %195 = vmatprep.subr.mxu0 0.0
    %196 = vmatpush1.msra.mxu0 0.0
    %197 = vmatprep.subr.mxu0 0.0
    %198 = vmatpush1.msra.mxu0 0.0
    %199 = vmatprep.subr.mxu0 0.0
    %200 = vmatpush1.msra.mxu0 0.0
    %201 = vmatprep.subr.mxu0 0.0
    %202 = vmatpush1.msra.mxu0 %v169
    %203 = vmatprep.subr.mxu0 0.0
    %204 = vmatpush2.msra.mxu0 0.0
    %205 = vmatprep.subr.mxu0 0.0
    %206 = vmatpush2.msra.mxu0 0.0
    %207 = vmatprep.subr.mxu0 0.0
    %208 = vmatpush2.msra.mxu0 0.0
    %209 = vmatprep.subr.mxu0 0.0
    %210 = vmatpush2.msra.mxu0 0.0
    %211 = vmatprep.subr.mxu0 0.0
    %212 = vmatpush2.msra.mxu0 0.0
    %213 = vmatprep.subr.mxu0 0.0
    %214 = vmatpush2.msra.mxu0 0.0
    %215 = vmatprep.subr.mxu0 0.0
    %216 = vmatpush2.msra.mxu0 0.0
    %217 = vmatprep.subr.mxu0 0.0
    %218 = vmatpush2.msra.mxu0 0.0
    %219 = vmatprep.subr.mxu0 0.0
    %220 = vmatpush2.msra.mxu0 0.0
    %221 = vmatprep.subr.mxu0 0.0
    %222 = vmatpush2.msra.mxu0 0.0
    %223 = vmatprep.subr.mxu0 0.0
    %224 = vmatpush2.msra.mxu0 0.0
    %225 = vmatprep.subr.mxu0 0.0
    %226 = vmatpush2.msra.mxu0 0.0
    %227 = vmatprep.subr.mxu0 0.0
    %228 = vmatpush2.msra.mxu0 0.0
    %229 = vmatprep.subr.mxu0 0.0
    %230 = vmatpush2.msra.mxu0 0.0
    %231 = vmatprep.subr.mxu0 0.0
    %232 = vmatpush2.msra.mxu0 0.0
    %233 = vmatprep.subr.mxu0 0.0
    %234 = vmatpush2.msra.mxu0 0.0
    %235 = vmatprep.mubr.f32.mxu0 0.0
    %236 = vmatmul.mubr.f32.gmra.mxu0 %v165
    %v237 = vpop.f32.mrf.mxu0
    %v238 = vadd.f32 %v161, %v237
    %v239 = vpop.f32.mrf.mxu0
    %240 = vdwg.mxu0
    %v241 = vxor.u32 %v238, 2147483648
    %v242 = vmul.f32 %v241, 1.442695
    %v243 = vpow.pop %v242
    %v244 = vadd.f32 %v243, 1.0
    %v245 = vrcp.pop %v244
    %v246 = vmul.f32 1.0, %v245
    %v247 = vlaneseq
    %v248 = vshrl.u32 %v247, 7
    %v249 = vsub.s32 0, %v248
    %v250 = vrot.slane %v246, %v249
    %252 = vbcast.lane.b32.xlu0 %v250, 256
    %v253 = vpop.permute.xlu0 %252
    %v254 = vlaneseq
    %v255 = vshrl.u32 %v254, 7
    %v256 = vsub.s32 1, %v255
    %v257 = vrot.slane %v246, %v256
    %259 = vbcast.lane.b32.xlu0 %v257, 256
    %v260 = vpop.permute.xlu0 %259
    %v264 = vunpack.c.l.s4 839922192
    %v265 = vunpack.c.0.s8 %v264
    %v266 = vlaneseq
    %v267 = vshrl.u32 %v266, 7
    %v268 = vsub.s32 %v265, %v267
    %v269 = vrot.slane %v253, %v268
    %v271 = vunpack.c.l.s4 839922192
    %v272 = vunpack.c.0.s8 %v271
    %v273 = vlaneseq
    %v274 = vshrl.u32 %v273, 7
    %v275 = vsub.s32 %v272, %v274
    %v276 = vrot.slane %v260, %v275
    %v279 = vmul.f32 %v35, %v269
    %v280 = vmul.f32 %v36, %v276
    %281 = vst [vmem:[#allocation5] sm:$0xff] %v279
    %282 = vst [vmem:[#allocation5 + $0x8] sm:$0xff] %v280
    // Predicated region
    $region26: #{tpu_custom_call.1} parent=1 // pred_check
      _
    $region27: #{tpu_custom_call.1} parent=1 // pred_check_branch
      %284 = sbr.rel (0) target = $region29
    $region28: #{tpu_custom_call.1} parent=1 // pred_region
      %s286 = ssub.s32 256, 256
      %287 = vsyncadd [#allocation4], %s286
      %s288 = sshll.u32 [#allocation5], 4
      %s289 = int_to_ptr.vmem [resolvable:$true] %s288
      %294 = dma.vmem_to_hbm [thread:$0]  %s289, 256, %s5, [#allocation4], 128, 128, 8
    $region29: #{tpu_custom_call.1} parent=1 // pred_fallthru
      _
    // Predicated region
    $region30: #{tpu_custom_call.1} parent=1 // pred_check
      _
    $region31: #{tpu_custom_call.1} parent=1 // pred_check_branch
      %296 = sbr.rel (0) target = $region33
    $region32: #{tpu_custom_call.1} parent=1 // pred_region
      %297 = dma.done [#allocation4], 256
    $region33: #{tpu_custom_call.1} parent=1 // pred_fallthru
      _
    %298 = vsyncpa [#allocation3], 1
    %299 = vsyncpa [#allocation4], 1

</llo_original>
